<compile_context>
chip_gen: v5e
topology: v5e:2x2
jax: 0.10.0
libtpu: 0.0.40
codegen_flags: <defaults>
</compile_context>

<pallas_src>
import math

import jax
import jax.numpy as jnp
from jax.experimental import pallas as pl
from jax.experimental.pallas import tpu as pltpu


def _round_up(n: int, m: int) -> int:
    return ((n + m - 1) // m) * m


def _rbf_fc_kernel(x_ref, ref_ref, w0_ref, w1_ref, out_ref):
    """Gaussian RBF over reference points + 2-layer FC (relu), B on lanes.

    x_ref   : (1, TB)  radii tile, pre-scaled by sqrt(gamma)
    ref_ref : (R, 1)   reference points, pre-scaled by sqrt(gamma)
    w0_ref  : (U, R)   W0 (torch layout; no transpose needed in this layout)
    w1_ref  : (U, U)   W1 / sqrt(U) (scaling folded in by the wrapper)
    out_ref : (U, TB)  feature-major output tile
    """
    x = x_ref[...]            # (1, TB)
    ref = ref_ref[...]        # (R, 1)

    diff = x - ref            # (R, TB): diff[r, b] = sqrt(g)*x[b] - sqrt(g)*ref[r]
    basis = jnp.exp(-(diff * diff))                 # == exp(-gamma * d^2)

    # FC layer 0: relu(W0 @ basis).  K = R = 8; MXU underfill is fine (slack).
    h = jnp.dot(w0_ref[...], basis, preferred_element_type=jnp.float32)
    h = jnp.maximum(h, 0.0)

    # FC layer 1: relu((W1 / sqrt(U)) @ h) -- scale pre-folded by wrapper.
    h = jnp.dot(w1_ref[...], h, preferred_element_type=jnp.float32)
    h = jnp.maximum(h, 0.0)

    out_ref[...] = h.astype(out_ref.dtype)


def finite_element_radial_basis_features(x, reference_points, w0, w1,
                                         gamma: float = 4.0,
                                         out_dtype=jnp.float32):
    """Feature-major result.

    x                : (B,)   float radii
    reference_points : (R,)   float
    w0               : (U, R) float  (torch layout: (num_units, prev_num_units))
    w1               : (U, U) float
    returns          : (U, B) out_dtype  -- transpose of the module's (B, U)
                       output; take .T (or fuse the transpose downstream) to
                       recover the original contract.
    """
    B = x.shape[0]
    R = reference_points.shape[0]
    U = w0.shape[0]

    # --- batch tile selection ------------------------------------------------
    # Lane-aligned batch, then split into (at least) 2 tiles for v7x megacore,
    # capped at 4096 lanes per tile (plenty to amortise per-step overhead,
    # trivially inside scoped VMEM on v5e/v6e/v7x).
    B_lanes = _round_up(B, 128)
    TB = max(128, min(4096, _round_up(pl.cdiv(B_lanes, 2), 128)))
    n_tiles = pl.cdiv(B, TB)
    B_pad = n_tiles * TB

    # --- lane-dense operand layouts, constants folded ------------------------
    s = math.sqrt(float(gamma))  # exp(-g*d^2) == exp(-((s*x - s*ref))^2)
    x_row = jnp.pad(x.astype(jnp.float32) * s, (0, B_pad - B)).reshape(1, B_pad)
    ref_col = (reference_points.astype(jnp.float32) * s).reshape(R, 1)
    w0_k = w0.astype(jnp.float32)                               # (U, R)
    w1_k = (w1.astype(jnp.float32) / math.sqrt(U))              # (U, U)

    out_bytes = jnp.dtype(out_dtype).itemsize
    cost = pl.CostEstimate(
        flops=2 * B_pad * (R * U + U * U),
        transcendentals=B_pad * R,
        bytes_accessed=4 * (B_pad + R + U * R + U * U) + out_bytes * U * B,
    )

    # Output shape is the UNPADDED (U, B): Pallas masks the ragged last tile's
    # store, so no garbage columns are written and no post-slice is needed.
    out = pl.pallas_call(
        _rbf_fc_kernel,
        out_shape=jax.ShapeDtypeStruct((U, B), out_dtype),
        grid_spec=pl.GridSpec(
            grid=(n_tiles,),
            in_specs=[
                pl.BlockSpec((1, TB), lambda i: (0, i)),   # x tile (B on lanes)
                pl.BlockSpec((R, 1), lambda i: (0, 0)),    # reference pts (resident)
                pl.BlockSpec((U, R), lambda i: (0, 0)),    # W0 (resident)
                pl.BlockSpec((U, U), lambda i: (0, 0)),    # W1/sqrt(U) (resident)
            ],
            out_specs=pl.BlockSpec((U, TB), lambda i: (0, i)),
        ),
        compiler_params=pltpu.CompilerParams(
            dimension_semantics=("parallel",),  # shard B tiles across TCs on v7x
        ),
        cost_estimate=cost,
    )(x_row, ref_col, w0_k, w1_k)

    return out


def finite_element_radial_basis(x, reference_points, w0, w1, gamma: float = 4.0):
    """Compatibility wrapper preserving the module's (B, U) output contract.

    Prefer finite_element_radial_basis_features() and fuse the transpose into
    the consumer: this standalone .T is an extra full HBM read+write of the
    output and roughly doubles the cost of this memory-bound op.
    """
    return finite_element_radial_basis_features(
        x, reference_points, w0, w1, gamma=gamma).T


def _reference_jax(x, reference_points, w0, w1, gamma: float = 4.0):
    """Pure-JAX reference mirroring the PyTorch forward (gaussian rbf + relu FC)."""
    diff = x[:, None] - reference_points[None, :]
    basis = jnp.exp(-gamma * diff * diff)
    h = jnp.maximum(basis @ w0.T, 0.0)
    h = jnp.maximum(h @ (w1.T / math.sqrt(w1.shape[1])), 0.0)
    return h


if __name__ == "__main__":
    key = jax.random.PRNGKey(0)
    k_x1, k_x2, k_w0, k_w1 = jax.random.split(key, 4)

    R = 8    # num_reference_points (basis_size of the finite-element basis)
    U = 32   # num_units in the FC layers
    GAMMA = 4.0

    reference_points = jnp.linspace(0.0, 1.0, R, dtype=jnp.float32)
    w0 = jax.random.normal(k_w0, (U, R), dtype=jnp.float32)
    w1 = jax.random.normal(k_w1, (U, U), dtype=jnp.float32)

    # Case 1: B a multiple of the lane width (2 parallel tiles of TB=256).
    B1 = 512
    x1 = jax.random.uniform(k_x1, (B1,), dtype=jnp.float32)
    feat1 = jax.block_until_ready(
        finite_element_radial_basis_features(x1, reference_points, w0, w1, gamma=GAMMA))
    ref1 = _reference_jax(x1, reference_points, w0, w1, gamma=GAMMA)
    assert feat1.shape == (U, B1)
    assert jnp.allclose(feat1, ref1.T, atol=1e-5, rtol=1e-5), "mismatch (features, B=512)"

    # Compatibility (B, U) contract of the original module.
    out1 = jax.block_until_ready(
        finite_element_radial_basis(x1, reference_points, w0, w1, gamma=GAMMA))
    assert out1.shape == (B1, U)
    assert jnp.allclose(out1, ref1, atol=1e-5, rtol=1e-5), "mismatch (B,U contract, B=512)"

    # Case 2: ragged B exercising the padded-input / masked-output-store path.
    B2 = 200
    x2 = jax.random.uniform(k_x2, (B2,), dtype=jnp.float32)
    feat2 = jax.block_until_ready(
        finite_element_radial_basis_features(x2, reference_points, w0, w1, gamma=GAMMA))
    ref2 = _reference_jax(x2, reference_points, w0, w1, gamma=GAMMA)
    assert feat2.shape == (U, B2)
    assert jnp.allclose(feat2, ref2.T, atol=1e-5, rtol=1e-5), "mismatch (features, B=200)"

    print("KERNEL_OK")
</pallas_src>

<mosaic_0001>
module attributes {stable_mosaic.version = 11 : i64} {
  func.func @_rbf_fc_kernel(%arg0: i32, %arg1: memref<1x256xf32, #tpu.memory_space<vmem>>, %arg2: memref<8x1xf32, #tpu.memory_space<vmem>>, %arg3: memref<32x8xf32, #tpu.memory_space<vmem>>, %arg4: memref<32x32xf32, #tpu.memory_space<vmem>>, %arg5: memref<32x256xf32, #tpu.memory_space<vmem>>) attributes {dimension_semantics = [#tpu.dimension_semantics<parallel>], iteration_bounds = array<i64: 2>, scalar_prefetch = 0 : i64, scratch_operands = 0 : i64, tpu.core_type = #tpu.core_type<tc>, window_params = [{transform_indices = @transform_0, window_bounds = array<i64: 1, 256>}, {pipeline_mode = #tpu.pipeline_mode<synchronous>, transform_indices = @transform_1, window_bounds = array<i64: 8, 1>}, {pipeline_mode = #tpu.pipeline_mode<synchronous>, transform_indices = @transform_2, window_bounds = array<i64: 32, 8>}, {pipeline_mode = #tpu.pipeline_mode<synchronous>, transform_indices = @transform_3, window_bounds = array<i64: 32, 32>}, {transform_indices = @transform_4, window_bounds = array<i64: 32, 256>}]} {
    %c0 = arith.constant 0 : index
    %c0_0 = arith.constant 0 : index
    %0 = vector.load %arg1[%c0, %c0_0] : memref<1x256xf32, #tpu.memory_space<vmem>>, vector<1x256xf32>
    %c0_1 = arith.constant 0 : index
    %c0_2 = arith.constant 0 : index
    %1 = vector.load %arg2[%c0_1, %c0_2] : memref<8x1xf32, #tpu.memory_space<vmem>>, vector<8x1xf32>
    %2 = vector.broadcast %0 : vector<1x256xf32> to vector<8x256xf32>
    %3 = vector.broadcast %1 : vector<8x1xf32> to vector<8x256xf32>
    %4 = arith.subf %2, %3 : vector<8x256xf32>
    %5 = arith.mulf %4, %4 : vector<8x256xf32>
    %cst = arith.constant 0.000000e+00 : f32
    %6 = vector.broadcast %cst : f32 to vector<8x256xf32>
    %7 = arith.subf %6, %5 : vector<8x256xf32>
    %8 = math.exp %7 : vector<8x256xf32>
    %c0_3 = arith.constant 0 : index
    %c0_4 = arith.constant 0 : index
    %9 = vector.load %arg3[%c0_3, %c0_4] : memref<32x8xf32, #tpu.memory_space<vmem>>, vector<32x8xf32>
    %cst_5 = arith.constant dense<0.000000e+00> : vector<32x256xf32>
    %10 = tpu.matmul %9, %8, %cst_5 {dimension_numbers = #tpu.dot_dimension_numbers<[1], [0], [0], [1], [0, 0, 1, 1], [], []>} : vector<32x8xf32>, vector<8x256xf32>, vector<32x256xf32> -> vector<32x256xf32>
    %cst_6 = arith.constant 0.000000e+00 : f32
    %11 = vector.broadcast %cst_6 : f32 to vector<32x256xf32>
    %12 = arith.maximumf %10, %11 : vector<32x256xf32>
    %c0_7 = arith.constant 0 : index
    %c0_8 = arith.constant 0 : index
    %13 = vector.load %arg4[%c0_7, %c0_8] : memref<32x32xf32, #tpu.memory_space<vmem>>, vector<32x32xf32>
    %cst_9 = arith.constant dense<0.000000e+00> : vector<32x256xf32>
    %14 = tpu.matmul %13, %12, %cst_9 {dimension_numbers = #tpu.dot_dimension_numbers<[1], [0], [0], [1], [0, 0, 1, 1], [], []>} : vector<32x32xf32>, vector<32x256xf32>, vector<32x256xf32> -> vector<32x256xf32>
    %cst_10 = arith.constant 0.000000e+00 : f32
    %15 = vector.broadcast %cst_10 : f32 to vector<32x256xf32>
    %16 = arith.maximumf %14, %15 : vector<32x256xf32>
    %c0_11 = arith.constant 0 : index
    %c0_12 = arith.constant 0 : index
    %17 = vector.load %arg5[%c0_11, %c0_12] : memref<32x256xf32, #tpu.memory_space<vmem>>, vector<32x256xf32>
    tpu.vector_store %arg5[%c0_11, %c0_12], %16 {strides = array<i32>} : memref<32x256xf32, #tpu.memory_space<vmem>>, vector<32x256xf32>,
    return
  }
  func.func @transform_0(%arg0: i32) -> (i32, i32) {
    %c0_i32 = arith.constant 0 : i32
    %c0_i32_0 = arith.constant 0 : i32
    return %c0_i32, %arg0 : i32, i32
  }
  func.func @transform_1(%arg0: i32) -> (i32, i32) {
    %c0_i32 = arith.constant 0 : i32
    %c0_i32_0 = arith.constant 0 : i32
    %c0_i32_1 = arith.constant 0 : i32
    return %c0_i32, %c0_i32_0 : i32, i32
  }
  func.func @transform_2(%arg0: i32) -> (i32, i32) {
    %c0_i32 = arith.constant 0 : i32
    %c0_i32_0 = arith.constant 0 : i32
    %c0_i32_1 = arith.constant 0 : i32
    return %c0_i32, %c0_i32_0 : i32, i32
  }
  func.func @transform_3(%arg0: i32) -> (i32, i32) {
    %c0_i32 = arith.constant 0 : i32
    %c0_i32_0 = arith.constant 0 : i32
    %c0_i32_1 = arith.constant 0 : i32
    return %c0_i32, %c0_i32_0 : i32, i32
  }
  func.func @transform_4(%arg0: i32) -> (i32, i32) {
    %c0_i32 = arith.constant 0 : i32
    %c0_i32_0 = arith.constant 0 : i32
    return %c0_i32, %arg0 : i32, i32
  }
}

</mosaic_0001>

<llo_original>
// kernel: tpu_custom_call.1
$region0: #{tpu_custom_call.1}
  #allocation0 [shape = 'u32[]', space=smem, size = 0x4, offset = 0x4, fixed_abs, tag = 'smem constant byte address 0x4 - core index']
  #allocation1 [shape = 'u32[72,128]{1,0:T(1,128)}', space=vmem, size = 0x9000, scoped, tag = 'internal scratch']
  %s0 = inlined_call_operand.vmem [shape: f32[1,512], index: 0, kind: input, shape index: {}]
  %s1 = inlined_call_operand.vmem [shape: f32[8,1], index: 1, kind: input, shape index: {}]
  %s2 = inlined_call_operand.vmem [shape: f32[32,8], index: 2, kind: input, shape index: {}]
  %s3 = inlined_call_operand.vmem [shape: f32[32,32], index: 3, kind: input, shape index: {}]
  %s4 = inlined_call_operand.hbm [shape: f32[32,512], index: 4, kind: output, shape index: {}]
  %s5 = sld [smem:[#allocation0]]
  $region49: #{tpu_custom_call.1} parent=0
    _
  %s7 = ssub.s32 1, %s5
  %s8 = scalar_select 0, %s7, %s5
  $region1: #{tpu_custom_call.1} parent=0
    #allocation2 [shape = 'u8[65536]{0}', space=vmem, size = 0x10000, scoped, tag = 'output window, operand 0']
    #allocation3 [shape = 's32[2]{0}', space=sflag, size = 0x8, scoped, tag = 'scoped memory for tpu_custom_call.1']
    %9 = vsyncpa [#allocation3], 0
    %s10 = scalar_lea.sflag [#allocation3], 1
    %11 = vsyncpa %s10, 0
    loop: start=0, step=1, limit=4
    $region2: #{tpu_custom_call.1} parent=1 // loop_pre_header
      _
    $region3: #{tpu_custom_call.1} parent=1 // loop_header
      %s13 = sphi 0, %s17
      %p14 = scmp.ge.s32.totalorder %s13, 4
      %s23 = sphi 0, %s25
      %s26 = sphi 0, %s23
      %s27 = sphi 0, %s26
      %s43 = sphi 0, %s27
      %s47 = sphi 0, %s47
      %s49 = sphi 0, %s47
      %s50 = sphi 0, %s49
      %s64 = sphi 0, %s50
      %s68 = sphi 0, %s68
      %s70 = sphi 0, %s68
      %s71 = sphi 0, %s70
      %s85 = sphi 0, %s71
      %s89 = sphi 0, %s89
      %s91 = sphi 0, %s89
      %s92 = sphi 0, %s91
      %s106 = sphi 0, %s92
      %s112 = sphi 0, %s114
      %s115 = sphi 0, %s112
      %s116 = sphi 0, %s115
      %s132 = sphi 0, %s116
    $region4: #{tpu_custom_call.1} parent=1 // loop_header_branch
      %16 = sbr.rel (%p14) target = $region8
    $region5: #{tpu_custom_call.1} parent=1 // loop_body
      %s18 = ssub.s32 %s13, 1
      %s19 = ssub.s32 %s13, 2
      %s20 = sadd.s32 %s13, 1
      %s21 = ssub.s32 %s13, %s20
      %p22 = scmp.eq.s32.totalorder %s21, 0
      %s24 = sadd.s32 %s23, 1
      %s25 = scalar_select %p22, %s23, %s24
      %p28 = pneg %p22
      %p29 = scmp.eq.s32.totalorder %s13, 1
      %p30 = por %p28, %p29
      %p31 = scmp.ne.s32.totalorder %s23, %s26
      %p32 = scmp.eq.s32.totalorder %s13, 0
      %p33 = por %p31, %p32
      %p34 = scmp.ne.s32.totalorder %s23, %s26
      %p35 = scmp.eq.s32.totalorder %s18, 1
      %p36 = por %p34, %p35
      %p37 = scmp.ne.s32.totalorder %s26, %s27
      %p38 = scmp.eq.s32.totalorder %s18, 0
      %p39 = por %p37, %p38
      %p40 = scmp.ne.s32.totalorder %s26, %s27
      %p41 = scmp.eq.s32.totalorder %s19, 1
      %p42 = por %p40, %p41
      %p44 = scmp.ne.s32.totalorder %s27, %s43
      %p45 = scmp.eq.s32.totalorder %s19, 0
      %p46 = por %p44, %p45
      %s48 = sadd.s32 %s47, 1
      %p51 = scmp.eq.s32.totalorder %s13, 1
      %p52 = scmp.ne.s32.totalorder %s47, %s49
      %p53 = scmp.eq.s32.totalorder %s13, 0
      %p54 = por %p52, %p53
      %p55 = scmp.ne.s32.totalorder %s47, %s49
      %p56 = scmp.eq.s32.totalorder %s18, 1
      %p57 = por %p55, %p56
      %p58 = scmp.ne.s32.totalorder %s49, %s50
      %p59 = scmp.eq.s32.totalorder %s18, 0
      %p60 = por %p58, %p59
      %p61 = scmp.ne.s32.totalorder %s49, %s50
      %p62 = scmp.eq.s32.totalorder %s19, 1
      %p63 = por %p61, %p62
      %p65 = scmp.ne.s32.totalorder %s50, %s64
      %p66 = scmp.eq.s32.totalorder %s19, 0
      %p67 = por %p65, %p66
      %s69 = sadd.s32 %s68, 1
      %p72 = scmp.eq.s32.totalorder %s13, 1
      %p73 = scmp.ne.s32.totalorder %s68, %s70
      %p74 = scmp.eq.s32.totalorder %s13, 0
      %p75 = por %p73, %p74
      %p76 = scmp.ne.s32.totalorder %s68, %s70
      %p77 = scmp.eq.s32.totalorder %s18, 1
      %p78 = por %p76, %p77
      %p79 = scmp.ne.s32.totalorder %s70, %s71
      %p80 = scmp.eq.s32.totalorder %s18, 0
      %p81 = por %p79, %p80
      %p82 = scmp.ne.s32.totalorder %s70, %s71
      %p83 = scmp.eq.s32.totalorder %s19, 1
      %p84 = por %p82, %p83
      %p86 = scmp.ne.s32.totalorder %s71, %s85
      %p87 = scmp.eq.s32.totalorder %s19, 0
      %p88 = por %p86, %p87
      %s90 = sadd.s32 %s89, 1
      %p93 = scmp.eq.s32.totalorder %s13, 1
      %p94 = scmp.ne.s32.totalorder %s89, %s91
      %p95 = scmp.eq.s32.totalorder %s13, 0
      %p96 = por %p94, %p95
      %p97 = scmp.ne.s32.totalorder %s89, %s91
      %p98 = scmp.eq.s32.totalorder %s18, 1
      %p99 = por %p97, %p98
      %p100 = scmp.ne.s32.totalorder %s91, %s92
      %p101 = scmp.eq.s32.totalorder %s18, 0
      %p102 = por %p100, %p101
      %p103 = scmp.ne.s32.totalorder %s91, %s92
      %p104 = scmp.eq.s32.totalorder %s19, 1
      %p105 = por %p103, %p104
      %p107 = scmp.ne.s32.totalorder %s92, %s106
      %p108 = scmp.eq.s32.totalorder %s19, 0
      %p109 = por %p107, %p108
      %s110 = ssub.s32 %s13, %s20
      %p111 = scmp.eq.s32.totalorder %s110, 0
      %s113 = sadd.s32 %s112, 1
      %s114 = scalar_select %p111, %s112, %s113
      %p117 = pneg %p111
      %p118 = scmp.eq.s32.totalorder %s13, 1
      %p119 = por %p117, %p118
      %p120 = scmp.ne.s32.totalorder %s112, %s115
      %p121 = scmp.eq.s32.totalorder %s13, 0
      %p122 = por %p120, %p121
      %p123 = scmp.ne.s32.totalorder %s112, %s115
      %p124 = scmp.eq.s32.totalorder %s18, 1
      %p125 = por %p123, %p124
      %p126 = scmp.ne.s32.totalorder %s115, %s116
      %p127 = scmp.eq.s32.totalorder %s18, 0
      %p128 = por %p126, %p127
      %p129 = scmp.ne.s32.totalorder %s115, %s116
      %p130 = scmp.eq.s32.totalorder %s19, 1
      %p131 = por %p129, %p130
      %p133 = scmp.ne.s32.totalorder %s116, %s132
      %p134 = scmp.eq.s32.totalorder %s19, 0
      %p135 = por %p133, %p134
      %p136 = scmp.le.s32.totalorder 1, %s13
      %p137 = scmp.lt.s32.totalorder %s13, 3
      %p138 = pnand %p136, %p137
      %p139 = pneg %p138
      // Predicated region
      $region9: #{tpu_custom_call.1} parent=5 // pred_check
        _
      $region10: #{tpu_custom_call.1} parent=5 // pred_check_branch
        %141 = sbr.rel (%p138) target = $region12
      $region11: #{tpu_custom_call.1} parent=5 // pred_region
        %s142 = ssub.s32 %s13, 1
        // Predicated region
        $region13: #{tpu_custom_call.1} parent=11 // pred_check
          %p143 = pneg %p60
        $region14: #{tpu_custom_call.1} parent=11 // pred_check_branch
          %145 = sbr.rel (%p143) target = $region16
        $region15: #{tpu_custom_call.1} parent=11 // pred_region
          _
        $region16: #{tpu_custom_call.1} parent=11 // pred_fallthru
          _
        // Predicated region
        $region17: #{tpu_custom_call.1} parent=11 // pred_check
          %p146 = pneg %p81
        $region18: #{tpu_custom_call.1} parent=11 // pred_check_branch
          %148 = sbr.rel (%p146) target = $region20
        $region19: #{tpu_custom_call.1} parent=11 // pred_region
          _
        $region20: #{tpu_custom_call.1} parent=11 // pred_fallthru
          _
        // Predicated region
        $region21: #{tpu_custom_call.1} parent=11 // pred_check
          %p149 = pneg %p102
        $region22: #{tpu_custom_call.1} parent=11 // pred_check_branch
          %151 = sbr.rel (%p149) target = $region24
        $region23: #{tpu_custom_call.1} parent=11 // pred_region
          _
        $region24: #{tpu_custom_call.1} parent=11 // pred_fallthru
          _
      $region12: #{tpu_custom_call.1} parent=5 // pred_fallthru
        _
      %p152 = scmp.lt.s32.totalorder %s13, 2
      // Predicated region
      $region25: #{tpu_custom_call.1} parent=5 // pred_check
        %p153 = pneg %p152
      $region26: #{tpu_custom_call.1} parent=5 // pred_check_branch
        %155 = sbr.rel (%p153) target = $region28
      $region27: #{tpu_custom_call.1} parent=5 // pred_region
        // Predicated region
        $region29: #{tpu_custom_call.1} parent=27 // pred_check
          %p156 = pneg %p33
        $region30: #{tpu_custom_call.1} parent=27 // pred_check_branch
          %158 = sbr.rel (%p156) target = $region32
        $region31: #{tpu_custom_call.1} parent=27 // pred_region
          %s159 = smul.u32 2, %s13
          %p160 = scmp.lt.s32.totalorder %s159, 3
          %s161 = scalar_select %p160, %s159, 3
          %s162 = scalar_lea.vmem %s0, %s161
          %s163 = smul.u32 2, %s13
        $region32: #{tpu_custom_call.1} parent=27 // pred_fallthru
          _
      $region28: #{tpu_custom_call.1} parent=5 // pred_fallthru
        _
      %p164 = scmp.le.s32.totalorder 1, %s13
      %p165 = scmp.lt.s32.totalorder %s13, 3
      %p166 = pnand %p164, %p165
      %p167 = pneg %p166
      // Predicated region
      $region33: #{tpu_custom_call.1} parent=5 // pred_check
        _
      $region34: #{tpu_custom_call.1} parent=5 // pred_check_branch
        %169 = sbr.rel (%p166) target = $region36
      $region35: #{tpu_custom_call.1} parent=5 // pred_region
        %s170 = ssub.s32 %s13, 1
        %s171 = smul.u32 2, %s18
        %p172 = scmp.lt.s32.totalorder %s171, 3
        %s173 = scalar_select %p172, %s171, 3
        %s174 = scalar_lea.vmem %s0, %s173
        %p175 = pneg %p39
        %p176 = pneg %p36
        %p177 = pneg %p60
        %p178 = pneg %p57
        %p179 = pneg %p81
        %p180 = pneg %p78
        %p181 = pneg %p102
        %p182 = pneg %p99
        %p183 = pneg %p128
        %p184 = pneg %p125
        %s185 = sand.u32 %s115, 1
        %s186 = scalar_lea.sflag [#allocation3], %s185
        %s187 = sand.u32 %s115, 1
        %s188 = smul.addr %s187, 64
        %s189 = scalar_lea.vmem [#allocation2], %s188
        %s190 = smul.u32 2, %s18
        %p191 = scmp.lt.s32.totalorder %s190, 3
        %s192 = scalar_select %p191, %s190, 3
        %s193 = scalar_lea.vmem %s0, %s192
        %s194 = smul.u32 2, %s18
        %s195 = smul.u32 2, %s18
        %v196 = vld [vmem:[%s193] sm:$0x3]
        %v197 = vld [vmem:[%s1] sm:$0xff]
        %v199 = vperm.slane %v196, 0
        %v200 = vperm.slane %v196, 1
        %204 = vset.pattern.permute.xlu0 0
        %205 = vperm.xlu0 %204, %v197
        %v206 = vpop.permute.xlu0 %205
        %v208 = vsub.f32 %v199, %v206
        %v209 = vsub.f32 %v200, %v206
        %v210 = vmul.f32 %v208, %v208
        %v211 = vmul.f32 %v209, %v209
        %v212 = vsub.f32 0.0, %v210
        %v213 = vsub.f32 0.0, %v211
        %v214 = vmul.f32 %v212, 1.442695
        %v215 = vpow.pop %v214
        %v216 = vmul.f32 %v213, 1.442695
        %v217 = vpow.pop %v216
        %v218 = vld [vmem:[%s2] sm:$0xff]
        %v219 = vld [vmem:[%s2 + $0x8] sm:$0xff]
        %v220 = vld [vmem:[%s2 + $0x10] sm:$0xff]
        %v221 = vld [vmem:[%s2 + $0x18] sm:$0xff]
        %vm222 = vcmask 64512
        %v224 = vsel %vm222, %v218, 0
        %v227 = vsel %vm222, %v219, 0
        %v230 = vsel %vm222, %v220, 0
        %v233 = vsel %vm222, %v221, 0
        %235 = vmatpush.msra.mxu0 0.0
        %236 = vmatpush.msra.mxu0 0.0
        %237 = vmatpush.msra.mxu0 0.0
        %238 = vmatpush.msra.mxu0 0.0
        %239 = vmatpush.msra.mxu0 0.0
        %240 = vmatpush.msra.mxu0 0.0
        %241 = vmatpush.msra.mxu0 0.0
        %242 = vmatpush.msra.mxu0 0.0
        %243 = vmatpush.msra.mxu0 0.0
        %244 = vmatpush.msra.mxu0 0.0
        %245 = vmatpush.msra.mxu0 0.0
        %246 = vmatpush.msra.mxu0 0.0
        %247 = vmatpush.msra.mxu0 0.0
        %248 = vmatpush.msra.mxu0 0.0
        %249 = vmatpush.msra.mxu0 0.0
        %250 = vmatpush.msra.mxu0 %v215
        %251 = vmatmul.f32.gmra.mxu0 %v224
        %v252 = vpop.f32.mrf.mxu0
        %v253 = vadd.f32 0.0, %v252
        %254 = vmatmul.f32.gmra.mxu0 %v227
        %v255 = vpop.f32.mrf.mxu0
        %v256 = vadd.f32 0.0, %v255
        %257 = vmatmul.f32.gmra.mxu0 %v230
        %v258 = vpop.f32.mrf.mxu0
        %v259 = vadd.f32 0.0, %v258
        %260 = vmatmul.f32.gmra.mxu0 %v233
        %v261 = vpop.f32.mrf.mxu0
        %v262 = vadd.f32 0.0, %v261
        %263 = vdwg.mxu0
        %264 = vmatpush.msra.mxu0 0.0
        %265 = vmatpush.msra.mxu0 0.0
        %266 = vmatpush.msra.mxu0 0.0
        %267 = vmatpush.msra.mxu0 0.0
        %268 = vmatpush.msra.mxu0 0.0
        %269 = vmatpush.msra.mxu0 0.0
        %270 = vmatpush.msra.mxu0 0.0
        %271 = vmatpush.msra.mxu0 0.0
        %272 = vmatpush.msra.mxu0 0.0
        %273 = vmatpush.msra.mxu0 0.0
        %274 = vmatpush.msra.mxu0 0.0
        %275 = vmatpush.msra.mxu0 0.0
        %276 = vmatpush.msra.mxu0 0.0
        %277 = vmatpush.msra.mxu0 0.0
        %278 = vmatpush.msra.mxu0 0.0
        %279 = vmatpush.msra.mxu0 %v217
        %280 = vmatmul.f32.gmra.mxu0 %v224
        %v281 = vpop.f32.mrf.mxu0
        %v282 = vadd.f32 0.0, %v281
        %283 = vmatmul.f32.gmra.mxu0 %v227
        %v284 = vpop.f32.mrf.mxu0
        %v285 = vadd.f32 0.0, %v284
        %286 = vmatmul.f32.gmra.mxu0 %v230
        %v287 = vpop.f32.mrf.mxu0
        %v288 = vadd.f32 0.0, %v287
        %289 = vmatmul.f32.gmra.mxu0 %v233
        %v290 = vpop.f32.mrf.mxu0
        %v291 = vadd.f32 0.0, %v290
        %292 = vdwg.mxu0
        %v293 = vmax.f32 %v253, 0.0
        %v294 = vmax.f32 %v282, 0.0
        %v295 = vmax.f32 %v256, 0.0
        %v296 = vmax.f32 %v285, 0.0
        %v297 = vmax.f32 %v259, 0.0
        %v298 = vmax.f32 %v288, 0.0
        %v299 = vmax.f32 %v262, 0.0
        %v300 = vmax.f32 %v291, 0.0
        %v301 = vld [vmem:[%s3] sm:$0xff]
        %v302 = vld [vmem:[%s3 + $0x8] sm:$0xff]
        %v303 = vld [vmem:[%s3 + $0x10] sm:$0xff]
        %v304 = vld [vmem:[%s3 + $0x18] sm:$0xff]
        %vm305 = vcmask 261120
        %v307 = vsel %vm305, %v301, 0
        %v310 = vsel %vm305, %v302, 0
        %v313 = vsel %vm305, %v303, 0
        %v316 = vsel %vm305, %v304, 0
        %318 = vmatpush.msra.mxu0 0.0
        %319 = vmatpush.msra.mxu0 0.0
        %320 = vmatpush.msra.mxu0 0.0
        %321 = vmatpush.msra.mxu0 0.0
        %322 = vmatpush.msra.mxu0 0.0
        %323 = vmatpush.msra.mxu0 0.0
        %324 = vmatpush.msra.mxu0 0.0
        %325 = vmatpush.msra.mxu0 0.0
        %326 = vmatpush.msra.mxu0 0.0
        %327 = vmatpush.msra.mxu0 0.0
        %328 = vmatpush.msra.mxu0 0.0
        %329 = vmatpush.msra.mxu0 0.0
        %330 = vmatpush.msra.mxu0 %v299
        %331 = vmatpush.msra.mxu0 %v297
        %332 = vmatpush.msra.mxu0 %v295
        %333 = vmatpush.msra.mxu0 %v293
        %334 = vmatmul.f32.gmra.mxu0 %v307
        %v335 = vpop.f32.mrf.mxu0
        %v336 = vadd.f32 0.0, %v335
        %337 = vmatmul.f32.gmra.mxu0 %v310
        %v338 = vpop.f32.mrf.mxu0
        %v339 = vadd.f32 0.0, %v338
        %340 = vmatmul.f32.gmra.mxu0 %v313
        %v341 = vpop.f32.mrf.mxu0
        %v342 = vadd.f32 0.0, %v341
        %343 = vmatmul.f32.gmra.mxu0 %v316
        %v344 = vpop.f32.mrf.mxu0
        %v345 = vadd.f32 0.0, %v344
        %346 = vdwg.mxu0
        %347 = vmatpush.msra.mxu0 0.0
        %348 = vmatpush.msra.mxu0 0.0
        %349 = vmatpush.msra.mxu0 0.0
        %350 = vmatpush.msra.mxu0 0.0
        %351 = vmatpush.msra.mxu0 0.0
        %352 = vmatpush.msra.mxu0 0.0
        %353 = vmatpush.msra.mxu0 0.0
        %354 = vmatpush.msra.mxu0 0.0
        %355 = vmatpush.msra.mxu0 0.0
        %356 = vmatpush.msra.mxu0 0.0
        %357 = vmatpush.msra.mxu0 0.0
        %358 = vmatpush.msra.mxu0 0.0
        %359 = vmatpush.msra.mxu0 %v300
        %360 = vmatpush.msra.mxu0 %v298
        %361 = vmatpush.msra.mxu0 %v296
        %362 = vmatpush.msra.mxu0 %v294
        %363 = vmatmul.f32.gmra.mxu0 %v307
        %v364 = vpop.f32.mrf.mxu0
        %v365 = vadd.f32 0.0, %v364
        %366 = vmatmul.f32.gmra.mxu0 %v310
        %v367 = vpop.f32.mrf.mxu0
        %v368 = vadd.f32 0.0, %v367
        %369 = vmatmul.f32.gmra.mxu0 %v313
        %v370 = vpop.f32.mrf.mxu0
        %v371 = vadd.f32 0.0, %v370
        %372 = vmatmul.f32.gmra.mxu0 %v316
        %v373 = vpop.f32.mrf.mxu0
        %v374 = vadd.f32 0.0, %v373
        %375 = vdwg.mxu0
        %v376 = vmax.f32 %v336, 0.0
        %v377 = vmax.f32 %v365, 0.0
        %v378 = vmax.f32 %v339, 0.0
        %v379 = vmax.f32 %v368, 0.0
        %v380 = vmax.f32 %v342, 0.0
        %v381 = vmax.f32 %v371, 0.0
        %v382 = vmax.f32 %v345, 0.0
        %v383 = vmax.f32 %v374, 0.0
        %384 = vst [vmem:[%s189] sm:$0xff] %v376
        %385 = vst [vmem:[%s189 + $0x8] sm:$0xff] %v377
        %386 = vst [vmem:[%s189 + $0x10] sm:$0xff] %v378
        %387 = vst [vmem:[%s189 + $0x18] sm:$0xff] %v379
        %388 = vst [vmem:[%s189 + $0x20] sm:$0xff] %v380
        %389 = vst [vmem:[%s189 + $0x28] sm:$0xff] %v381
        %390 = vst [vmem:[%s189 + $0x30] sm:$0xff] %v382
        %391 = vst [vmem:[%s189 + $0x38] sm:$0xff] %v383
        %s392 = sand.u32 %s115, 1
        %s393 = scalar_lea.sflag [#allocation3], %s392
        %s394 = sand.u32 %s115, 1
        %s395 = smul.addr %s394, 64
        %s396 = scalar_lea.vmem [#allocation2], %s395
        // Predicated region
        $region37: #{tpu_custom_call.1} parent=35 // pred_check
          %p397 = pneg %p125
        $region38: #{tpu_custom_call.1} parent=35 // pred_check_branch
          %399 = sbr.rel (%p397) target = $region40
        $region39: #{tpu_custom_call.1} parent=35 // pred_region
          %s400 = smul.u32 2, %s18
          %402 = vsyncadd %s393, 0
          %s403 = smul.addr %s400, 8
          %s404 = scalar_lea.hbm %s4, %s403
          %s405 = sshll.u32 %s396, 4
          %s406 = int_to_ptr.vmem [resolvable:$true] %s405
          %s407 = sshll.u32 %s404, 4
          %s408 = int_to_ptr.hbm [resolvable:$true] %s407
          %413 = dma.vmem_to_hbm [thread:$0]  %s406, 1024, %s408, %s393, 256, 512, 16
        $region40: #{tpu_custom_call.1} parent=35 // pred_fallthru
          _
      $region36: #{tpu_custom_call.1} parent=5 // pred_fallthru
        _
      %p414 = scmp.le.s32.totalorder 2, %s13
      // Predicated region
      $region41: #{tpu_custom_call.1} parent=5 // pred_check
        %p415 = pneg %p414
      $region42: #{tpu_custom_call.1} parent=5 // pred_check_branch
        %417 = sbr.rel (%p415) target = $region44
      $region43: #{tpu_custom_call.1} parent=5 // pred_region
        %s418 = ssub.s32 %s13, 2
        // Predicated region
        $region45: #{tpu_custom_call.1} parent=43 // pred_check
          %p419 = pneg %p131
        $region46: #{tpu_custom_call.1} parent=43 // pred_check_branch
          %421 = sbr.rel (%p419) target = $region48
        $region47: #{tpu_custom_call.1} parent=43 // pred_region
          %s422 = sand.u32 %s116, 1
          %s423 = scalar_lea.sflag [#allocation3], %s422
          %s424 = sand.u32 %s116, 1
          %s425 = smul.addr %s424, 64
          %s426 = scalar_lea.vmem [#allocation2], %s425
          %428 = dma.done %s423, 1024
        $region48: #{tpu_custom_call.1} parent=43 // pred_fallthru
          _
      $region44: #{tpu_custom_call.1} parent=5 // pred_fallthru
        _
    $region6: #{tpu_custom_call.1} parent=1 // loop_footer
      %s17 = sadd.s32 1, %s13
    $region7: #{tpu_custom_call.1} parent=1 // loop_footer_branch
      %12 = sbr.rel target = $region3
    $region8: #{tpu_custom_call.1} parent=1 // loop_exit
      _
    %429 = vsyncpa [#allocation3], 1
    %s430 = scalar_lea.sflag [#allocation3], 1
    %431 = vsyncpa %s430, 1

</llo_original>
